<compile_context>
chip_gen: v6e
topology: v6e:2x2x1
jax: 0.10.0
libtpu: 0.0.40
codegen_flags: <defaults>
</compile_context>

<pallas_src>
import functools

import jax
import jax.numpy as jnp
from jax.experimental import pallas as pl
from jax.experimental.pallas import tpu as pltpu


def _round_up(x, m):
    return ((x + m - 1) // m) * m


def _linear_relu_kernel(x_ref, w_ref, b_ref, o_ref):
    # x_ref: [tile_m, E] (native dtype), w_ref: [E, d_model] bf16,
    # b_ref: [1, d_model] f32, o_ref: [tile_m, d_model] f32.
    x = x_ref[...].astype(jnp.bfloat16)          # cast in-kernel (no wrapper pass)
    acc = jnp.dot(x, w_ref[...], preferred_element_type=jnp.float32)
    acc = acc + b_ref[...]                       # f32 bias broadcast over rows
    o_ref[...] = jnp.maximum(acc, 0.0).astype(o_ref.dtype)


def prepare_params(weight, bias):
    """Hoist once per model: weight [d_model, 112] (nn.Linear layout), bias [d_model].

    Returns (w_t bf16 [112, d_model], bias f32 [1, d_model]).
    """
    d_model, e = weight.shape
    w_t = jnp.transpose(weight).astype(jnp.bfloat16)           # [E, d_model]
    b = bias.astype(jnp.float32).reshape(1, d_model)
    return w_t, b


def _pick_tile_m(M, E, d_model, x_itemsize, out_itemsize, tile_m):
    # At least 2 grid steps so both v7x TensorCores get work on small batches.
    t = min(tile_m, _round_up(max(-(-M // 2), 8), 8))
    # Keep double-buffered x/out blocks + resident weight within a conservative
    # budget that fits every generation's scoped VMEM default.
    budget = 12 * 1024 * 1024

    def vmem_bytes(tt):
        return (2 * tt * E * x_itemsize            # x blocks, double-buffered
                + 2 * tt * d_model * out_itemsize  # out blocks, double-buffered
                + E * d_model * 2                  # resident bf16 weight
                + d_model * 4)                     # resident f32 bias

    while t > 128 and vmem_bytes(t) > budget:
        t = _round_up(t // 2, 8)
    return max(t, 8)


@functools.partial(jax.jit, static_argnames=("tile_m",))
def embeddings2_forward(x, w_t_bf16, b_f32, *, tile_m=1024):
    """x: [B, V, 112] (any float dtype); w_t_bf16: [112, d_model]; b_f32: [1, d_model].

    Returns ReLU(x @ W^T + b) in float32, shape [B, V, d_model].
    """
    B, V, E = x.shape
    Ew, d_model = w_t_bf16.shape
    assert E == Ew

    M = B * V
    x2d = x.reshape(M, E)                          # no pad, no dtype pass

    tile_m_eff = _pick_tile_m(M, E, d_model, x2d.dtype.itemsize, 4, tile_m)
    grid_m = -(-M // tile_m_eff)                   # cdiv; partial last block OK

    cost = pl.CostEstimate(
        flops=2 * M * E * d_model,
        bytes_accessed=M * E * x2d.dtype.itemsize + E * d_model * 2 + M * d_model * 4,
        transcendentals=0,
    )

    out2d = pl.pallas_call(
        _linear_relu_kernel,
        out_shape=jax.ShapeDtypeStruct((M, d_model), jnp.float32),
        grid=(grid_m,),
        in_specs=[
            pl.BlockSpec((tile_m_eff, E), lambda i: (i, 0)),   # x row-tiles
            pl.BlockSpec((E, d_model), lambda i: (0, 0)),      # weight resident
            pl.BlockSpec((1, d_model), lambda i: (0, 0)),      # bias resident
        ],
        out_specs=pl.BlockSpec((tile_m_eff, d_model), lambda i: (i, 0)),
        compiler_params=pltpu.CompilerParams(
            dimension_semantics=("parallel",),
        ),
        cost_estimate=cost,
    )(x2d, w_t_bf16, b_f32)

    return out2d.reshape(B, V, d_model)


if __name__ == "__main__":
    d_model = 32          # hidden size
    B, V, E = 2, 8, 112   # batch, tokens, input features (module hardcodes 112)

    key = jax.random.PRNGKey(0)
    kx, kw, kb = jax.random.split(key, 3)

    # Deterministic synthetic parameters (shapes match nn.Linear(112, d_model)).
    x = jax.random.normal(kx, (B, V, E), dtype=jnp.float32)
    weight = jax.random.normal(kw, (d_model, E), dtype=jnp.float32) * 0.05
    bias = jax.random.normal(kb, (d_model,), dtype=jnp.float32) * 0.05

    # Hoisted once (not inside the jitted forward).
    w_t_bf16, b_f32 = prepare_params(weight, bias)

    out = embeddings2_forward(x, w_t_bf16, b_f32)
    out = jax.block_until_ready(out)

    # Reference check in plain JAX (f32); bf16 MXU operands -> looser tolerance.
    ref = jnp.maximum(jnp.einsum("bve,de->bvd", x, weight) + bias, 0.0)
    assert out.shape == (B, V, d_model)
    assert out.dtype == jnp.float32
    assert jnp.allclose(out, ref, atol=1e-2, rtol=1e-2), (
        float(jnp.max(jnp.abs(out - ref)))
    )

    print("KERNEL_OK")
</pallas_src>

<mosaic_0001>
module attributes {stable_mosaic.version = 11 : i64} {
  func.func @_linear_relu_kernel(%arg0: i32, %arg1: memref<8x112xf32, #tpu.memory_space<vmem>>, %arg2: memref<112x32xbf16, #tpu.memory_space<vmem>>, %arg3: memref<1x32xf32, #tpu.memory_space<vmem>>, %arg4: memref<8x32xf32, #tpu.memory_space<vmem>>) attributes {dimension_semantics = [#tpu.dimension_semantics<parallel>], iteration_bounds = array<i64: 2>, scalar_prefetch = 0 : i64, scratch_operands = 0 : i64, tpu.core_type = #tpu.core_type<tc>, window_params = [{transform_indices = @transform_0, window_bounds = array<i64: 8, 112>}, {pipeline_mode = #tpu.pipeline_mode<synchronous>, transform_indices = @transform_1, window_bounds = array<i64: 112, 32>}, {pipeline_mode = #tpu.pipeline_mode<synchronous>, transform_indices = @transform_2, window_bounds = array<i64: 1, 32>}, {transform_indices = @transform_3, window_bounds = array<i64: 8, 32>}]} {
    %c0 = arith.constant 0 : index
    %c0_0 = arith.constant 0 : index
    %0 = vector.load %arg1[%c0, %c0_0] : memref<8x112xf32, #tpu.memory_space<vmem>>, vector<8x112xf32>
    %1 = arith.truncf %0 : vector<8x112xf32> to vector<8x112xbf16>
    %c0_1 = arith.constant 0 : index
    %c0_2 = arith.constant 0 : index
    %2 = vector.load %arg2[%c0_1, %c0_2] : memref<112x32xbf16, #tpu.memory_space<vmem>>, vector<112x32xbf16>
    %cst = arith.constant dense<0.000000e+00> : vector<8x32xf32>
    %3 = tpu.matmul %1, %2, %cst {dimension_numbers = #tpu.dot_dimension_numbers<[1], [0], [0], [1], [0, 0, 1, 1], [], []>} : vector<8x112xbf16>, vector<112x32xbf16>, vector<8x32xf32> -> vector<8x32xf32>
    %c0_3 = arith.constant 0 : index
    %c0_4 = arith.constant 0 : index
    %4 = vector.load %arg3[%c0_3, %c0_4] : memref<1x32xf32, #tpu.memory_space<vmem>>, vector<1x32xf32>
    %5 = vector.broadcast %4 : vector<1x32xf32> to vector<8x32xf32>
    %6 = arith.addf %3, %5 : vector<8x32xf32>
    %cst_5 = arith.constant 0.000000e+00 : f32
    %7 = vector.broadcast %cst_5 : f32 to vector<8x32xf32>
    %8 = arith.maximumf %6, %7 : vector<8x32xf32>
    %c0_6 = arith.constant 0 : index
    %c0_7 = arith.constant 0 : index
    %9 = vector.load %arg4[%c0_6, %c0_7] : memref<8x32xf32, #tpu.memory_space<vmem>>, vector<8x32xf32>
    tpu.vector_store %arg4[%c0_6, %c0_7], %8 {strides = array<i32>} : memref<8x32xf32, #tpu.memory_space<vmem>>, vector<8x32xf32>,
    return
  }
  func.func @transform_0(%arg0: i32) -> (i32, i32) {
    %c0_i32 = arith.constant 0 : i32
    %c0_i32_0 = arith.constant 0 : i32
    return %arg0, %c0_i32 : i32, i32
  }
  func.func @transform_1(%arg0: i32) -> (i32, i32) {
    %c0_i32 = arith.constant 0 : i32
    %c0_i32_0 = arith.constant 0 : i32
    %c0_i32_1 = arith.constant 0 : i32
    return %c0_i32, %c0_i32_0 : i32, i32
  }
  func.func @transform_2(%arg0: i32) -> (i32, i32) {
    %c0_i32 = arith.constant 0 : i32
    %c0_i32_0 = arith.constant 0 : i32
    %c0_i32_1 = arith.constant 0 : i32
    return %c0_i32, %c0_i32_0 : i32, i32
  }
  func.func @transform_3(%arg0: i32) -> (i32, i32) {
    %c0_i32 = arith.constant 0 : i32
    %c0_i32_0 = arith.constant 0 : i32
    return %arg0, %c0_i32 : i32, i32
  }
}

</mosaic_0001>

<llo_original>
// kernel: embeddings2_forward.1
$region0: #{embeddings2_forward.1}
  #allocation0 [shape = 'u32[]', space=smem, size = 0x4, offset = 0x4, fixed_abs, tag = 'smem constant byte address 0x4 - core index']
  #allocation1 [shape = 'u32[144,128]{1,0:T(1,128)}', space=vmem, size = 0x12000, scoped, tag = 'internal scratch']
  %s0 = inlined_call_operand.vmem [shape: f32[16,112], index: 0, kind: input, shape index: {}]
  %s1 = inlined_call_operand.vmem [shape: bf16[112,32], index: 1, kind: input, shape index: {}]
  %s2 = inlined_call_operand.vmem [shape: f32[1,32], index: 2, kind: input, shape index: {}]
  %s3 = inlined_call_operand.hbm [shape: f32[16,32], index: 3, kind: output, shape index: {}]
  %s4 = sld [smem:[#allocation0]]
  $region45: #{embeddings2_forward.1} parent=0
    _
  %s6 = ssub.s32 1, %s4
  %s7 = scalar_select 0, %s6, %s4
  $region1: #{embeddings2_forward.1} parent=0
    #allocation2 [shape = 'u8[8192]{0}', space=vmem, size = 0x2000, scoped, tag = 'output window, operand 0']
    #allocation3 [shape = 's32[2]{0}', space=sflag, size = 0x8, scoped, tag = 'scoped memory for embeddings2_forward.1']
    %8 = vsyncpa [#allocation3], 0
    %s9 = scalar_lea.sflag [#allocation3], 1
    %10 = vsyncpa %s9, 0
    loop: start=0, step=1, limit=4
    $region2: #{embeddings2_forward.1} parent=1 // loop_pre_header
      _
    $region3: #{embeddings2_forward.1} parent=1 // loop_header
      %s12 = sphi 0, %s16
      %p13 = scmp.ge.s32.totalorder %s12, 4
      %s22 = sphi 0, %s24
      %s25 = sphi 0, %s22
      %s26 = sphi 0, %s25
      %s42 = sphi 0, %s26
      %s46 = sphi 0, %s46
      %s48 = sphi 0, %s46
      %s49 = sphi 0, %s48
      %s63 = sphi 0, %s49
      %s67 = sphi 0, %s67
      %s69 = sphi 0, %s67
      %s70 = sphi 0, %s69
      %s84 = sphi 0, %s70
      %s90 = sphi 0, %s92
      %s93 = sphi 0, %s90
      %s94 = sphi 0, %s93
      %s110 = sphi 0, %s94
    $region4: #{embeddings2_forward.1} parent=1 // loop_header_branch
      %15 = sbr.rel (%p13) target = $region8
    $region5: #{embeddings2_forward.1} parent=1 // loop_body
      %s17 = ssub.s32 %s12, 1
      %s18 = ssub.s32 %s12, 2
      %s19 = sadd.s32 %s12, 1
      %s20 = ssub.s32 %s12, %s19
      %p21 = scmp.eq.s32.totalorder %s20, 0
      %s23 = sadd.s32 %s22, 1
      %s24 = scalar_select %p21, %s22, %s23
      %p27 = pneg %p21
      %p28 = scmp.eq.s32.totalorder %s12, 1
      %p29 = por %p27, %p28
      %p30 = scmp.ne.s32.totalorder %s22, %s25
      %p31 = scmp.eq.s32.totalorder %s12, 0
      %p32 = por %p30, %p31
      %p33 = scmp.ne.s32.totalorder %s22, %s25
      %p34 = scmp.eq.s32.totalorder %s17, 1
      %p35 = por %p33, %p34
      %p36 = scmp.ne.s32.totalorder %s25, %s26
      %p37 = scmp.eq.s32.totalorder %s17, 0
      %p38 = por %p36, %p37
      %p39 = scmp.ne.s32.totalorder %s25, %s26
      %p40 = scmp.eq.s32.totalorder %s18, 1
      %p41 = por %p39, %p40
      %p43 = scmp.ne.s32.totalorder %s26, %s42
      %p44 = scmp.eq.s32.totalorder %s18, 0
      %p45 = por %p43, %p44
      %s47 = sadd.s32 %s46, 1
      %p50 = scmp.eq.s32.totalorder %s12, 1
      %p51 = scmp.ne.s32.totalorder %s46, %s48
      %p52 = scmp.eq.s32.totalorder %s12, 0
      %p53 = por %p51, %p52
      %p54 = scmp.ne.s32.totalorder %s46, %s48
      %p55 = scmp.eq.s32.totalorder %s17, 1
      %p56 = por %p54, %p55
      %p57 = scmp.ne.s32.totalorder %s48, %s49
      %p58 = scmp.eq.s32.totalorder %s17, 0
      %p59 = por %p57, %p58
      %p60 = scmp.ne.s32.totalorder %s48, %s49
      %p61 = scmp.eq.s32.totalorder %s18, 1
      %p62 = por %p60, %p61
      %p64 = scmp.ne.s32.totalorder %s49, %s63
      %p65 = scmp.eq.s32.totalorder %s18, 0
      %p66 = por %p64, %p65
      %s68 = sadd.s32 %s67, 1
      %p71 = scmp.eq.s32.totalorder %s12, 1
      %p72 = scmp.ne.s32.totalorder %s67, %s69
      %p73 = scmp.eq.s32.totalorder %s12, 0
      %p74 = por %p72, %p73
      %p75 = scmp.ne.s32.totalorder %s67, %s69
      %p76 = scmp.eq.s32.totalorder %s17, 1
      %p77 = por %p75, %p76
      %p78 = scmp.ne.s32.totalorder %s69, %s70
      %p79 = scmp.eq.s32.totalorder %s17, 0
      %p80 = por %p78, %p79
      %p81 = scmp.ne.s32.totalorder %s69, %s70
      %p82 = scmp.eq.s32.totalorder %s18, 1
      %p83 = por %p81, %p82
      %p85 = scmp.ne.s32.totalorder %s70, %s84
      %p86 = scmp.eq.s32.totalorder %s18, 0
      %p87 = por %p85, %p86
      %s88 = ssub.s32 %s12, %s19
      %p89 = scmp.eq.s32.totalorder %s88, 0
      %s91 = sadd.s32 %s90, 1
      %s92 = scalar_select %p89, %s90, %s91
      %p95 = pneg %p89
      %p96 = scmp.eq.s32.totalorder %s12, 1
      %p97 = por %p95, %p96
      %p98 = scmp.ne.s32.totalorder %s90, %s93
      %p99 = scmp.eq.s32.totalorder %s12, 0
      %p100 = por %p98, %p99
      %p101 = scmp.ne.s32.totalorder %s90, %s93
      %p102 = scmp.eq.s32.totalorder %s17, 1
      %p103 = por %p101, %p102
      %p104 = scmp.ne.s32.totalorder %s93, %s94
      %p105 = scmp.eq.s32.totalorder %s17, 0
      %p106 = por %p104, %p105
      %p107 = scmp.ne.s32.totalorder %s93, %s94
      %p108 = scmp.eq.s32.totalorder %s18, 1
      %p109 = por %p107, %p108
      %p111 = scmp.ne.s32.totalorder %s94, %s110
      %p112 = scmp.eq.s32.totalorder %s18, 0
      %p113 = por %p111, %p112
      %p114 = scmp.le.s32.totalorder 1, %s12
      %p115 = scmp.lt.s32.totalorder %s12, 3
      %p116 = pnand %p114, %p115
      %p117 = pneg %p116
      // Predicated region
      $region9: #{embeddings2_forward.1} parent=5 // pred_check
        _
      $region10: #{embeddings2_forward.1} parent=5 // pred_check_branch
        %119 = sbr.rel (%p116) target = $region12
      $region11: #{embeddings2_forward.1} parent=5 // pred_region
        %s120 = ssub.s32 %s12, 1
        // Predicated region
        $region13: #{embeddings2_forward.1} parent=11 // pred_check
          %p121 = pneg %p59
        $region14: #{embeddings2_forward.1} parent=11 // pred_check_branch
          %123 = sbr.rel (%p121) target = $region16
        $region15: #{embeddings2_forward.1} parent=11 // pred_region
          _
        $region16: #{embeddings2_forward.1} parent=11 // pred_fallthru
          _
        // Predicated region
        $region17: #{embeddings2_forward.1} parent=11 // pred_check
          %p124 = pneg %p80
        $region18: #{embeddings2_forward.1} parent=11 // pred_check_branch
          %126 = sbr.rel (%p124) target = $region20
        $region19: #{embeddings2_forward.1} parent=11 // pred_region
          _
        $region20: #{embeddings2_forward.1} parent=11 // pred_fallthru
          _
      $region12: #{embeddings2_forward.1} parent=5 // pred_fallthru
        _
      %p127 = scmp.lt.s32.totalorder %s12, 2
      // Predicated region
      $region21: #{embeddings2_forward.1} parent=5 // pred_check
        %p128 = pneg %p127
      $region22: #{embeddings2_forward.1} parent=5 // pred_check_branch
        %130 = sbr.rel (%p128) target = $region24
      $region23: #{embeddings2_forward.1} parent=5 // pred_region
        // Predicated region
        $region25: #{embeddings2_forward.1} parent=23 // pred_check
          %p131 = pneg %p32
        $region26: #{embeddings2_forward.1} parent=23 // pred_check_branch
          %133 = sbr.rel (%p131) target = $region28
        $region27: #{embeddings2_forward.1} parent=23 // pred_region
          %p134 = scmp.lt.s32.totalorder %s12, 1
          %s135 = scalar_select %p134, %s12, 1
          %s136 = smul.addr %s135, 8
          %s137 = scalar_lea.vmem %s0, %s136
        $region28: #{embeddings2_forward.1} parent=23 // pred_fallthru
          _
      $region24: #{embeddings2_forward.1} parent=5 // pred_fallthru
        _
      %p138 = scmp.le.s32.totalorder 1, %s12
      %p139 = scmp.lt.s32.totalorder %s12, 3
      %p140 = pnand %p138, %p139
      %p141 = pneg %p140
      // Predicated region
      $region29: #{embeddings2_forward.1} parent=5 // pred_check
        _
      $region30: #{embeddings2_forward.1} parent=5 // pred_check_branch
        %143 = sbr.rel (%p140) target = $region32
      $region31: #{embeddings2_forward.1} parent=5 // pred_region
        %s144 = ssub.s32 %s12, 1
        %p145 = scmp.lt.s32.totalorder %s17, 1
        %s146 = scalar_select %p145, %s17, 1
        %s147 = smul.addr %s146, 8
        %s148 = scalar_lea.vmem %s0, %s147
        %p149 = pneg %p38
        %p150 = pneg %p35
        %p151 = pneg %p59
        %p152 = pneg %p56
        %p153 = pneg %p80
        %p154 = pneg %p77
        %p155 = pneg %p106
        %p156 = pneg %p103
        %s157 = sand.u32 %s93, 1
        %s158 = scalar_lea.sflag [#allocation3], %s157
        %s159 = sand.u32 %s93, 1
        %s160 = smul.addr %s159, 8
        %s161 = scalar_lea.vmem [#allocation2], %s160
        %p162 = scmp.lt.s32.totalorder %s17, 1
        %s163 = scalar_select %p162, %s17, 1
        %s164 = smul.addr %s163, 8
        %s165 = scalar_lea.vmem %s0, %s164
        %v167 = vld [vmem:[%s165] sm:$0xff]
        %v168 = vpack.c.bf16 %v167, %v167
        %v169 = vld [vmem:[%s1] sm:$0xf]
        %v170 = vld [vmem:[%s1 + $0x4] sm:$0xf]
        %v171 = vld [vmem:[%s1 + $0x8] sm:$0xf]
        %v172 = vld [vmem:[%s1 + $0xc] sm:$0xf]
        %v173 = vld [vmem:[%s1 + $0x10] sm:$0xf]
        %v174 = vld [vmem:[%s1 + $0x14] sm:$0xf]
        %v175 = vld [vmem:[%s1 + $0x18] sm:$0xf]
        %v176 = vld [vmem:[%s1 + $0x1c] sm:$0xf]
        %v177 = vld [vmem:[%s1 + $0x20] sm:$0xf]
        %v178 = vld [vmem:[%s1 + $0x24] sm:$0xf]
        %v179 = vld [vmem:[%s1 + $0x28] sm:$0xf]
        %v180 = vld [vmem:[%s1 + $0x2c] sm:$0xf]
        %v181 = vld [vmem:[%s1 + $0x30] sm:$0xf]
        %v182 = vld [vmem:[%s1 + $0x34] sm:$0xf]
        %v183 = vld [vmem:[%s2] sm:$0x1]
        %v185 = vlaneseq
        %v186 = vshrl.u32 %v185, 7
        %v187 = vsub.s32 0, %v186
        %v188 = vrot.slane %v183, %v187
        %v204 = vunpack.c.l.b16 %v169
        %v205 = vunpack.c.l.b16 %v170
        %v206 = vunpack.c.l.b16 %v171
        %v207 = vunpack.c.l.b16 %v172
        %v208 = vunpack.c.l.b16 %v173
        %v209 = vunpack.c.l.b16 %v174
        %v210 = vunpack.c.l.b16 %v175
        %v211 = vunpack.c.l.b16 %v176
        %v212 = vunpack.c.l.b16 %v177
        %v213 = vunpack.c.l.b16 %v178
        %v214 = vunpack.c.l.b16 %v179
        %v215 = vunpack.c.l.b16 %v180
        %v216 = vunpack.c.l.b16 %v181
        %v217 = vunpack.c.l.b16 %v182
        %v218 = vpack.c.b16 %v205, %v204
        %v219 = vpack.c.b16 %v207, %v206
        %v220 = vpack.c.b16 %v209, %v208
        %v221 = vpack.c.b16 %v211, %v210
        %v222 = vpack.c.b16 %v213, %v212
        %v223 = vpack.c.b16 %v215, %v214
        %v224 = vpack.c.b16 %v217, %v216
        %vm232 = vcmask 916480
        %v234 = vsel %vm232, %v168, 0
        %236 = vmatprep.subr.bf16.mxu0 0
        %237 = vmatpush1.bf16.msra.mxu0 0
        %238 = vmatprep.subr.bf16.mxu0 0
        %239 = vmatpush1.bf16.msra.mxu0 %v224
        %240 = vmatprep.subr.bf16.mxu0 0
        %241 = vmatpush1.bf16.msra.mxu0 %v223
        %242 = vmatprep.subr.bf16.mxu0 0
        %243 = vmatpush1.bf16.msra.mxu0 %v222
        %244 = vmatprep.subr.bf16.mxu0 0
        %245 = vmatpush1.bf16.msra.mxu0 %v221
        %246 = vmatprep.subr.bf16.mxu0 0
        %247 = vmatpush1.bf16.msra.mxu0 %v220
        %248 = vmatprep.subr.bf16.mxu0 0
        %249 = vmatpush1.bf16.msra.mxu0 %v219
        %250 = vmatprep.subr.bf16.mxu0 0
        %251 = vmatpush1.bf16.msra.mxu0 %v218
        %252 = vmatprep.subr.bf16.mxu0 0
        %253 = vmatpush2.bf16.msra.mxu0 0
        %254 = vmatprep.subr.bf16.mxu0 0
        %255 = vmatpush2.bf16.msra.mxu0 0
        %256 = vmatprep.subr.bf16.mxu0 0
        %257 = vmatpush2.bf16.msra.mxu0 0
        %258 = vmatprep.subr.bf16.mxu0 0
        %259 = vmatpush2.bf16.msra.mxu0 0
        %260 = vmatprep.subr.bf16.mxu0 0
        %261 = vmatpush2.bf16.msra.mxu0 0
        %262 = vmatprep.subr.bf16.mxu0 0
        %263 = vmatpush2.bf16.msra.mxu0 0
        %264 = vmatprep.subr.bf16.mxu0 0
        %265 = vmatpush2.bf16.msra.mxu0 0
        %266 = vmatprep.subr.bf16.mxu0 0
        %267 = vmatpush2.bf16.msra.mxu0 0
        %268 = vmatprep.mubr.bf16.mxu0 0
        %269 = vmatmul.mubr.bf16.gmra.mxu0 %v234
        %v270 = vpop.f32.mrf.mxu0
        %v271 = vadd.f32 %v188, %v270
        %v272 = vpop.f32.mrf.mxu0
        %v273 = vpop.f32.mrf.mxu0
        %v274 = vpop.f32.mrf.mxu0
        %275 = vdwg.mxu0
        %v276 = vmax.f32 %v271, 0.0
        %vm277 = vcmask 261120
        %278 = vst.msk [vmem:[%s161] sm:$0xff] %vm277, %v276
        %s279 = sand.u32 %s93, 1
        %s280 = scalar_lea.sflag [#allocation3], %s279
        %s281 = sand.u32 %s93, 1
        %s282 = smul.addr %s281, 8
        %s283 = scalar_lea.vmem [#allocation2], %s282
        // Predicated region
        $region33: #{embeddings2_forward.1} parent=31 // pred_check
          %p284 = pneg %p103
        $region34: #{embeddings2_forward.1} parent=31 // pred_check_branch
          %286 = sbr.rel (%p284) target = $region36
        $region35: #{embeddings2_forward.1} parent=31 // pred_region
          %s288 = ssub.s32 128, 128
          %289 = vsyncadd %s280, %s288
          %s290 = smul.addr %s17, 128
          %s291 = scalar_lea.hbm %s3, %s290
          %s293 = sshll.u32 %s283, 4
          %s294 = int_to_ptr.vmem [resolvable:$true] %s293
          %296 = dma.vmem_to_hbm [thread:$0]  %s294, 128, %s291, %s280
        $region36: #{embeddings2_forward.1} parent=31 // pred_fallthru
          _
      $region32: #{embeddings2_forward.1} parent=5 // pred_fallthru
        _
      %p297 = scmp.le.s32.totalorder 2, %s12
      // Predicated region
      $region37: #{embeddings2_forward.1} parent=5 // pred_check
        %p298 = pneg %p297
      $region38: #{embeddings2_forward.1} parent=5 // pred_check_branch
        %300 = sbr.rel (%p298) target = $region40
      $region39: #{embeddings2_forward.1} parent=5 // pred_region
        %s301 = ssub.s32 %s12, 2
        // Predicated region
        $region41: #{embeddings2_forward.1} parent=39 // pred_check
          %p302 = pneg %p109
        $region42: #{embeddings2_forward.1} parent=39 // pred_check_branch
          %304 = sbr.rel (%p302) target = $region44
        $region43: #{embeddings2_forward.1} parent=39 // pred_region
          %s305 = sand.u32 %s94, 1
          %s306 = scalar_lea.sflag [#allocation3], %s305
          %s307 = sand.u32 %s94, 1
          %s308 = smul.addr %s307, 8
          %s309 = scalar_lea.vmem [#allocation2], %s308
          %310 = dma.done %s306, 128
        $region44: #{embeddings2_forward.1} parent=39 // pred_fallthru
          _
      $region40: #{embeddings2_forward.1} parent=5 // pred_fallthru
        _
    $region6: #{embeddings2_forward.1} parent=1 // loop_footer
      %s16 = sadd.s32 1, %s12
    $region7: #{embeddings2_forward.1} parent=1 // loop_footer_branch
      %11 = sbr.rel target = $region3
    $region8: #{embeddings2_forward.1} parent=1 // loop_exit
      _
    %311 = vsyncpa [#allocation3], 1
    %s312 = scalar_lea.sflag [#allocation3], 1
    %313 = vsyncpa %s312, 1

</llo_original>
